<compile_context>
chip_gen: v7x
topology: tpu7x:2x2x1
jax: 0.10.0
libtpu: 0.0.40
codegen_flags: <defaults>
</compile_context>

<pallas_src>
import functools

import jax
import jax.numpy as jnp
from jax import lax
from jax.experimental import pallas as pl
from jax.experimental.pallas import tpu as pltpu


def _anc_disc_kernel(x_ref,
                     w1_ref, b1_ref,
                     w2_ref, b2_ref,
                     w3_ref, b3_ref,
                     w4_ref, b4_ref,
                     out_ref):
    """Fused 4-layer MLP.

    x_ref:  [bt, D]  f32 (natural layout, batch-major)
    w*_ref: [out_features, in_features] f32; b*_ref: [out_features, 1] f32
    out_ref:[1, bt]  f32 (batch on the lane axis -> lane-dense store)
    """
    x = x_ref[...]                                                    # f32 [bt, D]

    # layer 1: contract over D: [128, D] . [bt, D]^T -> [128, bt]  (MXU, trans_b form)
    h = lax.dot_general(w1_ref[...], x,
                        dimension_numbers=(((1,), (1,)), ((), ())),
                        preferred_element_type=jnp.float32)
    h = jnp.maximum(h + b1_ref[...], 0.0)                             # [128, bt]

    # layer 2: [256, 128] @ [128, bt] -> [256, bt]
    h = jnp.dot(w2_ref[...], h, preferred_element_type=jnp.float32)
    h = jnp.maximum(h + b2_ref[...], 0.0)

    # layer 3: [128, 256] @ [256, bt] -> [128, bt]
    h = jnp.dot(w3_ref[...], h, preferred_element_type=jnp.float32)
    h = jnp.maximum(h + b3_ref[...], 0.0)

    # layer 4 (128 -> 1): VPU multiply + sublane reduce instead of an M=1 MXU matmul;
    # the result lands naturally lane-dense as [1, bt].
    z = jnp.sum(h * w4_ref[...], axis=0, keepdims=True) + b4_ref[...]
    out_ref[...] = z.astype(out_ref.dtype)


def prepare_params(params):
    """One-time parameter prep (hoist out of the per-call forward).

    params: [(w1,b1),(w2,b2),(w3,b3),(w4,b4)] with w_i: [in, out], b_i: [out].
    Returns weights transposed to [out, in] and biases as [out, 1] columns, all f32.
    """
    (w1, b1), (w2, b2), (w3, b3), (w4, b4) = params
    f32 = jnp.float32
    return (w1.T.astype(f32), b1.reshape(-1, 1).astype(f32),   # [128, D],  [128, 1]
            w2.T.astype(f32), b2.reshape(-1, 1).astype(f32),   # [256, 128],[256, 1]
            w3.T.astype(f32), b3.reshape(-1, 1).astype(f32),   # [128, 256],[128, 1]
            w4.reshape(-1, 1).astype(f32), b4.reshape(1, 1).astype(f32))  # [128,1],[1,1]


def _pick_batch_tile(B, requested=None, max_tile=1024):
    """Multiple of 128, capped at max_tile. On v7x prefer a cap that keeps B/bt >= 2."""
    if requested is not None:
        assert requested % 128 == 0, "batch_tile must be a multiple of 128"
        return requested
    bt = pl.cdiv(B, 128) * 128
    return max(128, min(max_tile, bt))


@functools.partial(jax.jit, static_argnames=("batch_tile",))
def _anc_forward(x, prepped, *, batch_tile):
    w1t, b1c, w2t, b2c, w3t, b3c, w4c, b4c = prepped
    B, D = x.shape

    n_tiles = pl.cdiv(B, batch_tile)
    b_pad = n_tiles * batch_tile
    x_p = x if b_pad == B else jnp.pad(x, ((0, b_pad - B), (0, 0)))
    x_p = x_p.astype(jnp.float32)

    def full(arr):
        return pl.BlockSpec(arr.shape, lambda i: (0, 0))

    flops = 2 * b_pad * (D * 128 + 128 * 256 + 256 * 128 + 128)
    weight_bytes = sum(int(a.size) * 4 for a in prepped)
    bytes_accessed = b_pad * D * 4 + b_pad * 4 + weight_bytes

    out = pl.pallas_call(
        _anc_disc_kernel,
        out_shape=jax.ShapeDtypeStruct((1, b_pad), jnp.float32),
        grid=(n_tiles,),
        in_specs=[
            pl.BlockSpec((batch_tile, D), lambda i: (i, 0)),          # x tile, natural layout
            full(w1t), full(b1c),
            full(w2t), full(b2c),
            full(w3t), full(b3c),
            full(w4c), full(b4c),
        ],
        out_specs=pl.BlockSpec((1, batch_tile), lambda i: (0, i)),    # lane-dense output slab
        compiler_params=pltpu.CompilerParams(
            dimension_semantics=("parallel",)),
        cost_estimate=pl.CostEstimate(flops=flops, transcendentals=0,
                                      bytes_accessed=bytes_accessed),
    )(x_p, w1t, b1c, w2t, b2c, w3t, b3c, w4c, b4c)

    # [1, b_pad] (batch on lanes) -> [B, 1]; row-major reshape preserves batch order.
    return out.reshape(b_pad, 1)[:B]


def anc_discriminator(x, params, *, batch_tile=None):
    """x: [B, input_size] float32.  Returns validity: [B, 1] float32.

    params: raw [(w, b), ...] as in init_params (w: [in, out], b: [out]).
    For repeated calls with the same params, call prepare_params once and use _anc_forward.
    """
    B, _ = x.shape
    bt = _pick_batch_tile(B, batch_tile)
    prepped = prepare_params(params)
    return _anc_forward(x, prepped, batch_tile=bt)


def init_params(key, input_size):
    """Deterministic init mimicking torch.nn.Linear default (U[-1/sqrt(fan_in), +])."""
    dims = [(input_size, 128), (128, 256), (256, 128), (128, 1)]
    params = []
    for (fan_in, fan_out) in dims:
        key, kw, kb = jax.random.split(key, 3)
        bound = 1.0 / jnp.sqrt(fan_in)
        w = jax.random.uniform(kw, (fan_in, fan_out), jnp.float32, -bound, bound)
        b = jax.random.uniform(kb, (fan_out,), jnp.float32, -bound, bound)
        params.append((w, b))
    return params


def _reference(x, params):
    h = x
    for i, (w, b) in enumerate(params):
        h = h @ w + b
        if i < len(params) - 1:
            h = jnp.maximum(h, 0.0)
    return h


if __name__ == "__main__":
    key = jax.random.PRNGKey(0)
    input_size = 32
    batch = 8

    kx, kp = jax.random.split(key)
    x = jax.random.normal(kx, (batch, input_size), jnp.float32)
    params = init_params(kp, input_size)

    out = anc_discriminator(x, params)
    jax.block_until_ready(out)

    ref = _reference(x, params)
    assert out.shape == (batch, 1)
    # All-f32 compute -> tight tolerance vs. the f32 reference.
    assert jnp.allclose(out, ref, atol=1e-4, rtol=1e-4), "mismatch vs reference"

    print("KERNEL_OK")
</pallas_src>

<mosaic_0001>
module attributes {stable_mosaic.version = 11 : i64} {
  func.func @_anc_disc_kernel(%arg0: i32, %arg1: memref<128x32xf32, #tpu.memory_space<vmem>>, %arg2: memref<128x32xf32, #tpu.memory_space<vmem>>, %arg3: memref<128x1xf32, #tpu.memory_space<vmem>>, %arg4: memref<256x128xf32, #tpu.memory_space<vmem>>, %arg5: memref<256x1xf32, #tpu.memory_space<vmem>>, %arg6: memref<128x256xf32, #tpu.memory_space<vmem>>, %arg7: memref<128x1xf32, #tpu.memory_space<vmem>>, %arg8: memref<128x1xf32, #tpu.memory_space<vmem>>, %arg9: memref<1x1xf32, #tpu.memory_space<vmem>>, %arg10: memref<1x128xf32, #tpu.memory_space<vmem>>) attributes {dimension_semantics = [#tpu.dimension_semantics<parallel>], iteration_bounds = array<i64: 1>, scalar_prefetch = 0 : i64, scratch_operands = 0 : i64, tpu.core_type = #tpu.core_type<tc>, window_params = [{transform_indices = @transform_0, window_bounds = array<i64: 128, 32>}, {pipeline_mode = #tpu.pipeline_mode<synchronous>, transform_indices = @transform_1, window_bounds = array<i64: 128, 32>}, {pipeline_mode = #tpu.pipeline_mode<synchronous>, transform_indices = @transform_2, window_bounds = array<i64: 128, 1>}, {pipeline_mode = #tpu.pipeline_mode<synchronous>, transform_indices = @transform_3, window_bounds = array<i64: 256, 128>}, {pipeline_mode = #tpu.pipeline_mode<synchronous>, transform_indices = @transform_4, window_bounds = array<i64: 256, 1>}, {pipeline_mode = #tpu.pipeline_mode<synchronous>, transform_indices = @transform_5, window_bounds = array<i64: 128, 256>}, {pipeline_mode = #tpu.pipeline_mode<synchronous>, transform_indices = @transform_6, window_bounds = array<i64: 128, 1>}, {pipeline_mode = #tpu.pipeline_mode<synchronous>, transform_indices = @transform_7, window_bounds = array<i64: 128, 1>}, {pipeline_mode = #tpu.pipeline_mode<synchronous>, transform_indices = @transform_8, window_bounds = array<i64: 1, 1>}, {transform_indices = @transform_9, window_bounds = array<i64: 1, 128>}]} {
    %c0 = arith.constant 0 : index
    %c0_0 = arith.constant 0 : index
    %0 = vector.load %arg1[%c0, %c0_0] : memref<128x32xf32, #tpu.memory_space<vmem>>, vector<128x32xf32>
    %c0_1 = arith.constant 0 : index
    %c0_2 = arith.constant 0 : index
    %1 = vector.load %arg2[%c0_1, %c0_2] : memref<128x32xf32, #tpu.memory_space<vmem>>, vector<128x32xf32>
    %cst = arith.constant dense<0.000000e+00> : vector<128x128xf32>
    %2 = tpu.matmul %1, %0, %cst {dimension_numbers = #tpu.dot_dimension_numbers<[1], [1], [0], [0], [0, 0, 1, 0], [], []>} : vector<128x32xf32>, vector<128x32xf32>, vector<128x128xf32> -> vector<128x128xf32>
    %c0_3 = arith.constant 0 : index
    %c0_4 = arith.constant 0 : index
    %3 = vector.load %arg3[%c0_3, %c0_4] : memref<128x1xf32, #tpu.memory_space<vmem>>, vector<128x1xf32>
    %4 = vector.broadcast %3 : vector<128x1xf32> to vector<128x128xf32>
    %5 = arith.addf %2, %4 : vector<128x128xf32>
    %cst_5 = arith.constant 0.000000e+00 : f32
    %6 = vector.broadcast %cst_5 : f32 to vector<128x128xf32>
    %7 = arith.maximumf %5, %6 : vector<128x128xf32>
    %c0_6 = arith.constant 0 : index
    %c0_7 = arith.constant 0 : index
    %8 = vector.load %arg4[%c0_6, %c0_7] : memref<256x128xf32, #tpu.memory_space<vmem>>, vector<256x128xf32>
    %cst_8 = arith.constant dense<0.000000e+00> : vector<256x128xf32>
    %9 = tpu.matmul %8, %7, %cst_8 {dimension_numbers = #tpu.dot_dimension_numbers<[1], [0], [0], [1], [0, 0, 1, 1], [], []>} : vector<256x128xf32>, vector<128x128xf32>, vector<256x128xf32> -> vector<256x128xf32>
    %c0_9 = arith.constant 0 : index
    %c0_10 = arith.constant 0 : index
    %10 = vector.load %arg5[%c0_9, %c0_10] : memref<256x1xf32, #tpu.memory_space<vmem>>, vector<256x1xf32>
    %11 = vector.broadcast %10 : vector<256x1xf32> to vector<256x128xf32>
    %12 = arith.addf %9, %11 : vector<256x128xf32>
    %cst_11 = arith.constant 0.000000e+00 : f32
    %13 = vector.broadcast %cst_11 : f32 to vector<256x128xf32>
    %14 = arith.maximumf %12, %13 : vector<256x128xf32>
    %c0_12 = arith.constant 0 : index
    %c0_13 = arith.constant 0 : index
    %15 = vector.load %arg6[%c0_12, %c0_13] : memref<128x256xf32, #tpu.memory_space<vmem>>, vector<128x256xf32>
    %cst_14 = arith.constant dense<0.000000e+00> : vector<128x128xf32>
    %16 = tpu.matmul %15, %14, %cst_14 {dimension_numbers = #tpu.dot_dimension_numbers<[1], [0], [0], [1], [0, 0, 1, 1], [], []>} : vector<128x256xf32>, vector<256x128xf32>, vector<128x128xf32> -> vector<128x128xf32>
    %c0_15 = arith.constant 0 : index
    %c0_16 = arith.constant 0 : index
    %17 = vector.load %arg7[%c0_15, %c0_16] : memref<128x1xf32, #tpu.memory_space<vmem>>, vector<128x1xf32>
    %18 = vector.broadcast %17 : vector<128x1xf32> to vector<128x128xf32>
    %19 = arith.addf %16, %18 : vector<128x128xf32>
    %cst_17 = arith.constant 0.000000e+00 : f32
    %20 = vector.broadcast %cst_17 : f32 to vector<128x128xf32>
    %21 = arith.maximumf %19, %20 : vector<128x128xf32>
    %c0_18 = arith.constant 0 : index
    %c0_19 = arith.constant 0 : index
    %22 = vector.load %arg8[%c0_18, %c0_19] : memref<128x1xf32, #tpu.memory_space<vmem>>, vector<128x1xf32>
    %23 = vector.broadcast %22 : vector<128x1xf32> to vector<128x128xf32>
    %24 = arith.mulf %21, %23 : vector<128x128xf32>
    %cst_20 = arith.constant dense<0.000000e+00> : vector<128xf32>
    %25 = vector.multi_reduction <add>, %24, %cst_20 [0] : vector<128x128xf32> to vector<128xf32>
    %26 = vector.shape_cast %25 : vector<128xf32> to vector<1x128xf32>
    %c0_21 = arith.constant 0 : index
    %c0_22 = arith.constant 0 : index
    %27 = vector.load %arg9[%c0_21, %c0_22] : memref<1x1xf32, #tpu.memory_space<vmem>>, vector<1x1xf32>
    %28 = vector.broadcast %27 : vector<1x1xf32> to vector<1x128xf32>
    %29 = arith.addf %26, %28 : vector<1x128xf32>
    %c0_23 = arith.constant 0 : index
    %c0_24 = arith.constant 0 : index
    %30 = vector.load %arg10[%c0_23, %c0_24] : memref<1x128xf32, #tpu.memory_space<vmem>>, vector<1x128xf32>
    tpu.vector_store %arg10[%c0_23, %c0_24], %29 {strides = array<i32>} : memref<1x128xf32, #tpu.memory_space<vmem>>, vector<1x128xf32>,
    return
  }
  func.func @transform_0(%arg0: i32) -> (i32, i32) {
    %c0_i32 = arith.constant 0 : i32
    %c0_i32_0 = arith.constant 0 : i32
    return %arg0, %c0_i32 : i32, i32
  }
  func.func @transform_1(%arg0: i32) -> (i32, i32) {
    %c0_i32 = arith.constant 0 : i32
    %c0_i32_0 = arith.constant 0 : i32
    %c0_i32_1 = arith.constant 0 : i32
    return %c0_i32, %c0_i32_0 : i32, i32
  }
  func.func @transform_2(%arg0: i32) -> (i32, i32) {
    %c0_i32 = arith.constant 0 : i32
    %c0_i32_0 = arith.constant 0 : i32
    %c0_i32_1 = arith.constant 0 : i32
    return %c0_i32, %c0_i32_0 : i32, i32
  }
  func.func @transform_3(%arg0: i32) -> (i32, i32) {
    %c0_i32 = arith.constant 0 : i32
    %c0_i32_0 = arith.constant 0 : i32
    %c0_i32_1 = arith.constant 0 : i32
    return %c0_i32, %c0_i32_0 : i32, i32
  }
  func.func @transform_4(%arg0: i32) -> (i32, i32) {
    %c0_i32 = arith.constant 0 : i32
    %c0_i32_0 = arith.constant 0 : i32
    %c0_i32_1 = arith.constant 0 : i32
    return %c0_i32, %c0_i32_0 : i32, i32
  }
  func.func @transform_5(%arg0: i32) -> (i32, i32) {
    %c0_i32 = arith.constant 0 : i32
    %c0_i32_0 = arith.constant 0 : i32
    %c0_i32_1 = arith.constant 0 : i32
    return %c0_i32, %c0_i32_0 : i32, i32
  }
  func.func @transform_6(%arg0: i32) -> (i32, i32) {
    %c0_i32 = arith.constant 0 : i32
    %c0_i32_0 = arith.constant 0 : i32
    %c0_i32_1 = arith.constant 0 : i32
    return %c0_i32, %c0_i32_0 : i32, i32
  }
  func.func @transform_7(%arg0: i32) -> (i32, i32) {
    %c0_i32 = arith.constant 0 : i32
    %c0_i32_0 = arith.constant 0 : i32
    %c0_i32_1 = arith.constant 0 : i32
    return %c0_i32, %c0_i32_0 : i32, i32
  }
  func.func @transform_8(%arg0: i32) -> (i32, i32) {
    %c0_i32 = arith.constant 0 : i32
    %c0_i32_0 = arith.constant 0 : i32
    %c0_i32_1 = arith.constant 0 : i32
    return %c0_i32, %c0_i32_0 : i32, i32
  }
  func.func @transform_9(%arg0: i32) -> (i32, i32) {
    %c0_i32 = arith.constant 0 : i32
    %c0_i32_0 = arith.constant 0 : i32
    return %c0_i32, %arg0 : i32, i32
  }
}

</mosaic_0001>

<llo_original>
// kernel: _anc_forward.1
$region0: #{_anc_forward.1}
  #allocation0 [shape = 'u32[]', space=smem, size = 0x4, offset = 0x4, fixed_abs, tag = 'smem constant byte address 0x4 - core index']
  #allocation1 [shape = 'u32[144,128]{1,0:T(1,128)}', space=vmem, size = 0x12000, scoped, tag = 'internal scratch']
  #allocation2 [shape = 'f32[1,1]{1,0:T(1,128)S(1)}', space=vmem, size = 0x200, scoped, tag = 'scoped memory for _anc_forward.1']
  %s0 = inlined_call_operand.vmem [shape: f32[128,32], index: 0, kind: input, shape index: {}]
  %s1 = inlined_call_operand.vmem [shape: f32[128,32], index: 1, kind: input, shape index: {}]
  %s2 = inlined_call_operand.vmem [shape: f32[128,1], index: 2, kind: input, shape index: {}]
  %s3 = inlined_call_operand.vmem [shape: f32[256,128], index: 3, kind: input, shape index: {}]
  %s4 = inlined_call_operand.vmem [shape: f32[256,1], index: 4, kind: input, shape index: {}]
  %s5 = inlined_call_operand.vmem [shape: f32[128,256], index: 5, kind: input, shape index: {}]
  %s6 = inlined_call_operand.vmem [shape: f32[128,1], index: 6, kind: input, shape index: {}]
  %s7 = inlined_call_operand.vmem [shape: f32[128,1], index: 7, kind: input, shape index: {}]
  %s8 = inlined_call_operand.<no memory space> [shape: f32[1,1], index: 8, kind: input, shape index: {}]
  %s9 = inlined_call_operand.vmem [shape: f32[1,128], index: 9, kind: output, shape index: {}]
  %s10 = sld [smem:[#allocation0]]
  $region46: #{_anc_forward.1} parent=0
    _
  %s12 = ssub.s32 1, %s10
  %s13 = scalar_select 0, %s12, %s10
  %v14 = vstv %s8
  %15 = vst [vmem:[#allocation2] sm:$0x1] %v14
  // Predicated region
  $region2: #{_anc_forward.1} parent=0 // pred_check
    _
  $region3: #{_anc_forward.1} parent=0 // pred_check_branch
    %17 = sbr.rel (0) target = $region5
  $region4: #{_anc_forward.1} parent=0 // pred_region
    _
  $region5: #{_anc_forward.1} parent=0 // pred_fallthru
    _
  // Predicated region
  $region6: #{_anc_forward.1} parent=0 // pred_check
    _
  $region7: #{_anc_forward.1} parent=0 // pred_check_branch
    %19 = sbr.rel (0) target = $region9
  $region8: #{_anc_forward.1} parent=0 // pred_region
    _
  $region9: #{_anc_forward.1} parent=0 // pred_fallthru
    _
  // Predicated region
  $region10: #{_anc_forward.1} parent=0 // pred_check
    _
  $region11: #{_anc_forward.1} parent=0 // pred_check_branch
    %21 = sbr.rel (0) target = $region13
  $region12: #{_anc_forward.1} parent=0 // pred_region
    _
  $region13: #{_anc_forward.1} parent=0 // pred_fallthru
    _
  // Predicated region
  $region14: #{_anc_forward.1} parent=0 // pred_check
    _
  $region15: #{_anc_forward.1} parent=0 // pred_check_branch
    %23 = sbr.rel (0) target = $region17
  $region16: #{_anc_forward.1} parent=0 // pred_region
    _
  $region17: #{_anc_forward.1} parent=0 // pred_fallthru
    _
  // Predicated region
  $region18: #{_anc_forward.1} parent=0 // pred_check
    _
  $region19: #{_anc_forward.1} parent=0 // pred_check_branch
    %25 = sbr.rel (0) target = $region21
  $region20: #{_anc_forward.1} parent=0 // pred_region
    _
  $region21: #{_anc_forward.1} parent=0 // pred_fallthru
    _
  // Predicated region
  $region22: #{_anc_forward.1} parent=0 // pred_check
    _
  $region23: #{_anc_forward.1} parent=0 // pred_check_branch
    %27 = sbr.rel (0) target = $region25
  $region24: #{_anc_forward.1} parent=0 // pred_region
    _
  $region25: #{_anc_forward.1} parent=0 // pred_fallthru
    _
  // Predicated region
  $region26: #{_anc_forward.1} parent=0 // pred_check
    _
  $region27: #{_anc_forward.1} parent=0 // pred_check_branch
    %29 = sbr.rel (0) target = $region29
  $region28: #{_anc_forward.1} parent=0 // pred_region
    _
  $region29: #{_anc_forward.1} parent=0 // pred_fallthru
    _
  // Predicated region
  $region30: #{_anc_forward.1} parent=0 // pred_check
    _
  $region31: #{_anc_forward.1} parent=0 // pred_check_branch
    %31 = sbr.rel (0) target = $region33
  $region32: #{_anc_forward.1} parent=0 // pred_region
    _
  $region33: #{_anc_forward.1} parent=0 // pred_fallthru
    _
  // Predicated region
  $region34: #{_anc_forward.1} parent=0 // pred_check
    _
  $region35: #{_anc_forward.1} parent=0 // pred_check_branch
    %33 = sbr.rel (0) target = $region37
  $region36: #{_anc_forward.1} parent=0 // pred_region
    _
  $region37: #{_anc_forward.1} parent=0 // pred_fallthru
    _
  %v34 = vld [vmem:[%s0] sm:$0xff]
  %v35 = vld [vmem:[%s0 + $0x8] sm:$0xff]
  %v36 = vld [vmem:[%s0 + $0x10] sm:$0xff]
  %v37 = vld [vmem:[%s0 + $0x18] sm:$0xff]
  %v38 = vld [vmem:[%s0 + $0x20] sm:$0xff]
  %v39 = vld [vmem:[%s0 + $0x28] sm:$0xff]
  %v40 = vld [vmem:[%s0 + $0x30] sm:$0xff]
  %v41 = vld [vmem:[%s0 + $0x38] sm:$0xff]
  %v42 = vld [vmem:[%s0 + $0x40] sm:$0xff]
  %v43 = vld [vmem:[%s0 + $0x48] sm:$0xff]
  %v44 = vld [vmem:[%s0 + $0x50] sm:$0xff]
  %v45 = vld [vmem:[%s0 + $0x58] sm:$0xff]
  %v46 = vld [vmem:[%s0 + $0x60] sm:$0xff]
  %v47 = vld [vmem:[%s0 + $0x68] sm:$0xff]
  %v48 = vld [vmem:[%s0 + $0x70] sm:$0xff]
  %v49 = vld [vmem:[%s0 + $0x78] sm:$0xff]
  %v50 = vld [vmem:[%s1] sm:$0xff]
  %v51 = vld [vmem:[%s1 + $0x8] sm:$0xff]
  %v52 = vld [vmem:[%s1 + $0x10] sm:$0xff]
  %v53 = vld [vmem:[%s1 + $0x18] sm:$0xff]
  %v54 = vld [vmem:[%s1 + $0x20] sm:$0xff]
  %v55 = vld [vmem:[%s1 + $0x28] sm:$0xff]
  %v56 = vld [vmem:[%s1 + $0x30] sm:$0xff]
  %v57 = vld [vmem:[%s1 + $0x38] sm:$0xff]
  %v58 = vld [vmem:[%s1 + $0x40] sm:$0xff]
  %v59 = vld [vmem:[%s1 + $0x48] sm:$0xff]
  %v60 = vld [vmem:[%s1 + $0x50] sm:$0xff]
  %v61 = vld [vmem:[%s1 + $0x58] sm:$0xff]
  %v62 = vld [vmem:[%s1 + $0x60] sm:$0xff]
  %v63 = vld [vmem:[%s1 + $0x68] sm:$0xff]
  %v64 = vld [vmem:[%s1 + $0x70] sm:$0xff]
  %v65 = vld [vmem:[%s1 + $0x78] sm:$0xff]
  %v66 = vld [vmem:[%s2] sm:$0xff]
  %v67 = vld [vmem:[%s2 + $0x8] sm:$0xff]
  %v68 = vld [vmem:[%s2 + $0x10] sm:$0xff]
  %v69 = vld [vmem:[%s2 + $0x18] sm:$0xff]
  %v70 = vld [vmem:[%s2 + $0x20] sm:$0xff]
  %v71 = vld [vmem:[%s2 + $0x28] sm:$0xff]
  %v72 = vld [vmem:[%s2 + $0x30] sm:$0xff]
  %v73 = vld [vmem:[%s2 + $0x38] sm:$0xff]
  %v74 = vld [vmem:[%s2 + $0x40] sm:$0xff]
  %v75 = vld [vmem:[%s2 + $0x48] sm:$0xff]
  %v76 = vld [vmem:[%s2 + $0x50] sm:$0xff]
  %v77 = vld [vmem:[%s2 + $0x58] sm:$0xff]
  %v78 = vld [vmem:[%s2 + $0x60] sm:$0xff]
  %v79 = vld [vmem:[%s2 + $0x68] sm:$0xff]
  %v80 = vld [vmem:[%s2 + $0x70] sm:$0xff]
  %v81 = vld [vmem:[%s2 + $0x78] sm:$0xff]
  %83 = vset.pattern.permute.xlu0 0
  %84 = vperm.xlu0 %83, %v66
  %v85 = vpop.permute.xlu0 %84
  %88 = vset.pattern.permute.xlu0 0
  %89 = vperm.xlu0 %88, %v67
  %v90 = vpop.permute.xlu0 %89
  %93 = vset.pattern.permute.xlu0 0
  %94 = vperm.xlu0 %93, %v68
  %v95 = vpop.permute.xlu0 %94
  %98 = vset.pattern.permute.xlu0 0
  %99 = vperm.xlu0 %98, %v69
  %v100 = vpop.permute.xlu0 %99
  %103 = vset.pattern.permute.xlu0 0
  %104 = vperm.xlu0 %103, %v70
  %v105 = vpop.permute.xlu0 %104
  %108 = vset.pattern.permute.xlu0 0
  %109 = vperm.xlu0 %108, %v71
  %v110 = vpop.permute.xlu0 %109
  %113 = vset.pattern.permute.xlu0 0
  %114 = vperm.xlu0 %113, %v72
  %v115 = vpop.permute.xlu0 %114
  %118 = vset.pattern.permute.xlu0 0
  %119 = vperm.xlu0 %118, %v73
  %v120 = vpop.permute.xlu0 %119
  %123 = vset.pattern.permute.xlu0 0
  %124 = vperm.xlu0 %123, %v74
  %v125 = vpop.permute.xlu0 %124
  %128 = vset.pattern.permute.xlu0 0
  %129 = vperm.xlu0 %128, %v75
  %v130 = vpop.permute.xlu0 %129
  %133 = vset.pattern.permute.xlu0 0
  %134 = vperm.xlu0 %133, %v76
  %v135 = vpop.permute.xlu0 %134
  %138 = vset.pattern.permute.xlu0 0
  %139 = vperm.xlu0 %138, %v77
  %v140 = vpop.permute.xlu0 %139
  %143 = vset.pattern.permute.xlu0 0
  %144 = vperm.xlu0 %143, %v78
  %v145 = vpop.permute.xlu0 %144
  %148 = vset.pattern.permute.xlu0 0
  %149 = vperm.xlu0 %148, %v79
  %v150 = vpop.permute.xlu0 %149
  %153 = vset.pattern.permute.xlu0 0
  %154 = vperm.xlu0 %153, %v80
  %v155 = vpop.permute.xlu0 %154
  %158 = vset.pattern.permute.xlu0 0
  %159 = vperm.xlu0 %158, %v81
  %v160 = vpop.permute.xlu0 %159
  %vm162 = vcmask 261120
  %v164 = vsel %vm162, %v50, 0
  %v167 = vsel %vm162, %v51, 0
  %v170 = vsel %vm162, %v52, 0
  %v173 = vsel %vm162, %v53, 0
  %v176 = vsel %vm162, %v54, 0
  %v179 = vsel %vm162, %v55, 0
  %v182 = vsel %vm162, %v56, 0
  %v185 = vsel %vm162, %v57, 0
  %v188 = vsel %vm162, %v58, 0
  %v191 = vsel %vm162, %v59, 0
  %v194 = vsel %vm162, %v60, 0
  %v197 = vsel %vm162, %v61, 0
  %v200 = vsel %vm162, %v62, 0
  %v203 = vsel %vm162, %v63, 0
  %v206 = vsel %vm162, %v64, 0
  %v209 = vsel %vm162, %v65, 0
  %v212 = vsel %vm162, %v34, 0
  %v215 = vsel %vm162, %v35, 0
  %v218 = vsel %vm162, %v36, 0
  %v221 = vsel %vm162, %v37, 0
  %v224 = vsel %vm162, %v38, 0
  %v227 = vsel %vm162, %v39, 0
  %v230 = vsel %vm162, %v40, 0
  %v233 = vsel %vm162, %v41, 0
  %v236 = vsel %vm162, %v42, 0
  %v239 = vsel %vm162, %v43, 0
  %v242 = vsel %vm162, %v44, 0
  %v245 = vsel %vm162, %v45, 0
  %v248 = vsel %vm162, %v46, 0
  %v251 = vsel %vm162, %v47, 0
  %v254 = vsel %vm162, %v48, 0
  %v257 = vsel %vm162, %v49, 0
  %259 = vmatprep.subr.mxu0 0.0
  %260 = vmatpush1.xpose.msra.mxu0 %v212
  %261 = vmatprep.subr.mxu0 0.0
  %262 = vmatpush1.xpose.msra.mxu0 %v215
  %263 = vmatprep.subr.mxu0 0.0
  %264 = vmatpush1.xpose.msra.mxu0 %v218
  %265 = vmatprep.subr.mxu0 0.0
  %266 = vmatpush1.xpose.msra.mxu0 %v221
  %267 = vmatprep.subr.mxu0 0.0
  %268 = vmatpush1.xpose.msra.mxu0 %v224
  %269 = vmatprep.subr.mxu0 0.0
  %270 = vmatpush1.xpose.msra.mxu0 %v227
  %271 = vmatprep.subr.mxu0 0.0
  %272 = vmatpush1.xpose.msra.mxu0 %v230
  %273 = vmatprep.subr.mxu0 0.0
  %274 = vmatpush1.xpose.msra.mxu0 %v233
  %275 = vmatprep.subr.mxu0 0.0
  %276 = vmatpush1.xpose.msra.mxu0 %v236
  %277 = vmatprep.subr.mxu0 0.0
  %278 = vmatpush1.xpose.msra.mxu0 %v239
  %279 = vmatprep.subr.mxu0 0.0
  %280 = vmatpush1.xpose.msra.mxu0 %v242
  %281 = vmatprep.subr.mxu0 0.0
  %282 = vmatpush1.xpose.msra.mxu0 %v245
  %283 = vmatprep.subr.mxu0 0.0
  %284 = vmatpush1.xpose.msra.mxu0 %v248
  %285 = vmatprep.subr.mxu0 0.0
  %286 = vmatpush1.xpose.msra.mxu0 %v251
  %287 = vmatprep.subr.mxu0 0.0
  %288 = vmatpush1.xpose.msra.mxu0 %v254
  %289 = vmatprep.subr.mxu0 0.0
  %290 = vmatpush1.xpose.msra.mxu0 %v257
  %291 = vmatprep.subr.mxu0 0.0
  %292 = vmatpush1.xpose.msra.mxu0 0.0
  %293 = vmatprep.subr.mxu0 0.0
  %294 = vmatpush1.xpose.msra.mxu0 0.0
  %295 = vmatprep.subr.mxu0 0.0
  %296 = vmatpush1.xpose.msra.mxu0 0.0
  %297 = vmatprep.subr.mxu0 0.0
  %298 = vmatpush1.xpose.msra.mxu0 0.0
  %299 = vmatprep.subr.mxu0 0.0
  %300 = vmatpush1.xpose.msra.mxu0 0.0
  %301 = vmatprep.subr.mxu0 0.0
  %302 = vmatpush1.xpose.msra.mxu0 0.0
  %303 = vmatprep.subr.mxu0 0.0
  %304 = vmatpush1.xpose.msra.mxu0 0.0
  %305 = vmatprep.subr.mxu0 0.0
  %306 = vmatpush1.xpose.msra.mxu0 0.0
  %307 = vmatprep.subr.mxu0 0.0
  %308 = vmatpush1.xpose.msra.mxu0 0.0
  %309 = vmatprep.subr.mxu0 0.0
  %310 = vmatpush1.xpose.msra.mxu0 0.0
  %311 = vmatprep.subr.mxu0 0.0
  %312 = vmatpush1.xpose.msra.mxu0 0.0
  %313 = vmatprep.subr.mxu0 0.0
  %314 = vmatpush1.xpose.msra.mxu0 0.0
  %315 = vmatprep.subr.mxu0 0.0
  %316 = vmatpush1.xpose.msra.mxu0 0.0
  %317 = vmatprep.subr.mxu0 0.0
  %318 = vmatpush1.xpose.msra.mxu0 0.0
  %319 = vmatprep.subr.mxu0 0.0
  %320 = vmatpush1.xpose.msra.mxu0 0.0
  %321 = vmatprep.subr.mxu0 0.0
  %322 = vmatpush1.xpose.msra.mxu0 0.0
  %323 = vmatprep.mubr.f32.mxu0 0.0
  %324 = vmatmul.mubr.f32.gmra.mrb[0].mxu0 %v164
  %v325 = vpop.f32.mrb[0].mxu0
  %v326 = vadd.f32 %v85, %v325
  %v327 = vpop.f32.mrb[0].mxu0
  %328 = vmatprep.mubr.f32.mxu0 0.0
  %329 = vmatmul.mubr.f32.gmra.mrb[0].mxu0 %v167
  %v330 = vpop.f32.mrb[0].mxu0
  %v331 = vadd.f32 %v90, %v330
  %v332 = vpop.f32.mrb[0].mxu0
  %333 = vmatprep.mubr.f32.mxu0 0.0
  %334 = vmatmul.mubr.f32.gmra.mrb[0].mxu0 %v170
  %v335 = vpop.f32.mrb[0].mxu0
  %v336 = vadd.f32 %v95, %v335
  %v337 = vpop.f32.mrb[0].mxu0
  %338 = vmatprep.mubr.f32.mxu0 0.0
  %339 = vmatmul.mubr.f32.gmra.mrb[0].mxu0 %v173
  %v340 = vpop.f32.mrb[0].mxu0
  %v341 = vadd.f32 %v100, %v340
  %v342 = vpop.f32.mrb[0].mxu0
  %343 = vmatprep.mubr.f32.mxu0 0.0
  %344 = vmatmul.mubr.f32.gmra.mrb[0].mxu0 %v176
  %v345 = vpop.f32.mrb[0].mxu0
  %v346 = vadd.f32 %v105, %v345
  %v347 = vpop.f32.mrb[0].mxu0
  %348 = vmatprep.mubr.f32.mxu0 0.0
  %349 = vmatmul.mubr.f32.gmra.mrb[0].mxu0 %v179
  %v350 = vpop.f32.mrb[0].mxu0
  %v351 = vadd.f32 %v110, %v350
  %v352 = vpop.f32.mrb[0].mxu0
  %353 = vmatprep.mubr.f32.mxu0 0.0
  %354 = vmatmul.mubr.f32.gmra.mrb[0].mxu0 %v182
  %v355 = vpop.f32.mrb[0].mxu0
  %v356 = vadd.f32 %v115, %v355
  %v357 = vpop.f32.mrb[0].mxu0
  %358 = vmatprep.mubr.f32.mxu0 0.0
  %359 = vmatmul.mubr.f32.gmra.mrb[0].mxu0 %v185
  %v360 = vpop.f32.mrb[0].mxu0
  %v361 = vadd.f32 %v120, %v360
  %v362 = vpop.f32.mrb[0].mxu0
  %363 = vmatprep.mubr.f32.mxu0 0.0
  %364 = vmatmul.mubr.f32.gmra.mrb[0].mxu0 %v188
  %v365 = vpop.f32.mrb[0].mxu0
  %v366 = vadd.f32 %v125, %v365
  %v367 = vpop.f32.mrb[0].mxu0
  %368 = vmatprep.mubr.f32.mxu0 0.0
  %369 = vmatmul.mubr.f32.gmra.mrb[0].mxu0 %v191
  %v370 = vpop.f32.mrb[0].mxu0
  %v371 = vadd.f32 %v130, %v370
  %v372 = vpop.f32.mrb[0].mxu0
  %373 = vmatprep.mubr.f32.mxu0 0.0
  %374 = vmatmul.mubr.f32.gmra.mrb[0].mxu0 %v194
  %v375 = vpop.f32.mrb[0].mxu0
  %v376 = vadd.f32 %v135, %v375
  %v377 = vpop.f32.mrb[0].mxu0
  %378 = vmatprep.mubr.f32.mxu0 0.0
  %379 = vmatmul.mubr.f32.gmra.mrb[0].mxu0 %v197
  %v380 = vpop.f32.mrb[0].mxu0
  %v381 = vadd.f32 %v140, %v380
  %v382 = vpop.f32.mrb[0].mxu0
  %383 = vmatprep.mubr.f32.mxu0 0.0
  %384 = vmatmul.mubr.f32.gmra.mrb[0].mxu0 %v200
  %v385 = vpop.f32.mrb[0].mxu0
  %v386 = vadd.f32 %v145, %v385
  %v387 = vpop.f32.mrb[0].mxu0
  %388 = vmatprep.mubr.f32.mxu0 0.0
  %389 = vmatmul.mubr.f32.gmra.mrb[0].mxu0 %v203
  %v390 = vpop.f32.mrb[0].mxu0
  %v391 = vadd.f32 %v150, %v390
  %v392 = vpop.f32.mrb[0].mxu0
  %393 = vmatprep.mubr.f32.mxu0 0.0
  %394 = vmatmul.mubr.f32.gmra.mrb[0].mxu0 %v206
  %v395 = vpop.f32.mrb[0].mxu0
  %v396 = vadd.f32 %v155, %v395
  %v397 = vpop.f32.mrb[0].mxu0
  %398 = vmatprep.mubr.f32.mxu0 0.0
  %399 = vmatmul.mubr.f32.gmra.mrb[0].mxu0 %v209
  %v400 = vpop.f32.mrb[0].mxu0
  %v401 = vadd.f32 %v160, %v400
  %v402 = vpop.f32.mrb[0].mxu0
  %403 = vdwg.mxu0
  %v404 = vmax.f32 %v326, 0.0
  %v405 = vmax.f32 %v331, 0.0
  %v406 = vmax.f32 %v336, 0.0
  %v407 = vmax.f32 %v341, 0.0
  %v408 = vmax.f32 %v346, 0.0
  %v409 = vmax.f32 %v351, 0.0
  %v410 = vmax.f32 %v356, 0.0
  %v411 = vmax.f32 %v361, 0.0
  %v412 = vmax.f32 %v366, 0.0
  %v413 = vmax.f32 %v371, 0.0
  %v414 = vmax.f32 %v376, 0.0
  %v415 = vmax.f32 %v381, 0.0
  %v416 = vmax.f32 %v386, 0.0
  %v417 = vmax.f32 %v391, 0.0
  %v418 = vmax.f32 %v396, 0.0
  %v419 = vmax.f32 %v401, 0.0
  %v420 = vld [vmem:[%s3] sm:$0xff]
  %v421 = vld [vmem:[%s3 + $0x8] sm:$0xff]
  %v422 = vld [vmem:[%s3 + $0x10] sm:$0xff]
  %v423 = vld [vmem:[%s3 + $0x18] sm:$0xff]
  %v424 = vld [vmem:[%s3 + $0x20] sm:$0xff]
  %v425 = vld [vmem:[%s3 + $0x28] sm:$0xff]
  %v426 = vld [vmem:[%s3 + $0x30] sm:$0xff]
  %v427 = vld [vmem:[%s3 + $0x38] sm:$0xff]
  %v428 = vld [vmem:[%s3 + $0x40] sm:$0xff]
  %v429 = vld [vmem:[%s3 + $0x48] sm:$0xff]
  %v430 = vld [vmem:[%s3 + $0x50] sm:$0xff]
  %v431 = vld [vmem:[%s3 + $0x58] sm:$0xff]
  %v432 = vld [vmem:[%s3 + $0x60] sm:$0xff]
  %v433 = vld [vmem:[%s3 + $0x68] sm:$0xff]
  %v434 = vld [vmem:[%s3 + $0x70] sm:$0xff]
  %v435 = vld [vmem:[%s3 + $0x78] sm:$0xff]
  %v436 = vld [vmem:[%s3 + $0x80] sm:$0xff]
  %v437 = vld [vmem:[%s3 + $0x88] sm:$0xff]
  %v438 = vld [vmem:[%s3 + $0x90] sm:$0xff]
  %v439 = vld [vmem:[%s3 + $0x98] sm:$0xff]
  %v440 = vld [vmem:[%s3 + $0xa0] sm:$0xff]
  %v441 = vld [vmem:[%s3 + $0xa8] sm:$0xff]
  %v442 = vld [vmem:[%s3 + $0xb0] sm:$0xff]
  %v443 = vld [vmem:[%s3 + $0xb8] sm:$0xff]
  %v444 = vld [vmem:[%s3 + $0xc0] sm:$0xff]
  %v445 = vld [vmem:[%s3 + $0xc8] sm:$0xff]
  %v446 = vld [vmem:[%s3 + $0xd0] sm:$0xff]
  %v447 = vld [vmem:[%s3 + $0xd8] sm:$0xff]
  %v448 = vld [vmem:[%s3 + $0xe0] sm:$0xff]
  %v449 = vld [vmem:[%s3 + $0xe8] sm:$0xff]
  %v450 = vld [vmem:[%s3 + $0xf0] sm:$0xff]
  %v451 = vld [vmem:[%s3 + $0xf8] sm:$0xff]
  %v452 = vld [vmem:[%s4] sm:$0xff]
  %v453 = vld [vmem:[%s4 + $0x8] sm:$0xff]
  %v454 = vld [vmem:[%s4 + $0x10] sm:$0xff]
  %v455 = vld [vmem:[%s4 + $0x18] sm:$0xff]
  %v456 = vld [vmem:[%s4 + $0x20] sm:$0xff]
  %v457 = vld [vmem:[%s4 + $0x28] sm:$0xff]
  %v458 = vld [vmem:[%s4 + $0x30] sm:$0xff]
  %v459 = vld [vmem:[%s4 + $0x38] sm:$0xff]
  %v460 = vld [vmem:[%s4 + $0x40] sm:$0xff]
  %v461 = vld [vmem:[%s4 + $0x48] sm:$0xff]
  %v462 = vld [vmem:[%s4 + $0x50] sm:$0xff]
  %v463 = vld [vmem:[%s4 + $0x58] sm:$0xff]
  %v464 = vld [vmem:[%s4 + $0x60] sm:$0xff]
  %v465 = vld [vmem:[%s4 + $0x68] sm:$0xff]
  %v466 = vld [vmem:[%s4 + $0x70] sm:$0xff]
  %v467 = vld [vmem:[%s4 + $0x78] sm:$0xff]
  %v468 = vld [vmem:[%s4 + $0x80] sm:$0xff]
  %v469 = vld [vmem:[%s4 + $0x88] sm:$0xff]
  %v470 = vld [vmem:[%s4 + $0x90] sm:$0xff]
  %v471 = vld [vmem:[%s4 + $0x98] sm:$0xff]
  %v472 = vld [vmem:[%s4 + $0xa0] sm:$0xff]
  %v473 = vld [vmem:[%s4 + $0xa8] sm:$0xff]
  %v474 = vld [vmem:[%s4 + $0xb0] sm:$0xff]
  %v475 = vld [vmem:[%s4 + $0xb8] sm:$0xff]
  %v476 = vld [vmem:[%s4 + $0xc0] sm:$0xff]
  %v477 = vld [vmem:[%s4 + $0xc8] sm:$0xff]
  %v478 = vld [vmem:[%s4 + $0xd0] sm:$0xff]
  %v479 = vld [vmem:[%s4 + $0xd8] sm:$0xff]
  %v480 = vld [vmem:[%s4 + $0xe0] sm:$0xff]
  %v481 = vld [vmem:[%s4 + $0xe8] sm:$0xff]
  %v482 = vld [vmem:[%s4 + $0xf0] sm:$0xff]
  %v483 = vld [vmem:[%s4 + $0xf8] sm:$0xff]
  %485 = vset.pattern.permute.xlu0 0
  %486 = vperm.xlu0 %485, %v452
  %v487 = vpop.permute.xlu0 %486
  %490 = vset.pattern.permute.xlu0 0
  %491 = vperm.xlu0 %490, %v453
  %v492 = vpop.permute.xlu0 %491
  %495 = vset.pattern.permute.xlu0 0
  %496 = vperm.xlu0 %495, %v454
  %v497 = vpop.permute.xlu0 %496
  %500 = vset.pattern.permute.xlu0 0
  %501 = vperm.xlu0 %500, %v455
  %v502 = vpop.permute.xlu0 %501
  %505 = vset.pattern.permute.xlu0 0
  %506 = vperm.xlu0 %505, %v456
  %v507 = vpop.permute.xlu0 %506
  %510 = vset.pattern.permute.xlu0 0
  %511 = vperm.xlu0 %510, %v457
  %v512 = vpop.permute.xlu0 %511
  %515 = vset.pattern.permute.xlu0 0
  %516 = vperm.xlu0 %515, %v458
  %v517 = vpop.permute.xlu0 %516
  %520 = vset.pattern.permute.xlu0 0
  %521 = vperm.xlu0 %520, %v459
  %v522 = vpop.permute.xlu0 %521
  %525 = vset.pattern.permute.xlu0 0
  %526 = vperm.xlu0 %525, %v460
  %v527 = vpop.permute.xlu0 %526
  %530 = vset.pattern.permute.xlu0 0
  %531 = vperm.xlu0 %530, %v461
  %v532 = vpop.permute.xlu0 %531
  %535 = vset.pattern.permute.xlu0 0
  %536 = vperm.xlu0 %535, %v462
  %v537 = vpop.permute.xlu0 %536
  %540 = vset.pattern.permute.xlu0 0
  %541 = vperm.xlu0 %540, %v463
  %v542 = vpop.permute.xlu0 %541
  %545 = vset.pattern.permute.xlu0 0
  %546 = vperm.xlu0 %545, %v464
  %v547 = vpop.permute.xlu0 %546
  %550 = vset.pattern.permute.xlu0 0
  %551 = vperm.xlu0 %550, %v465
  %v552 = vpop.permute.xlu0 %551
  %555 = vset.pattern.permute.xlu0 0
  %556 = vperm.xlu0 %555, %v466
  %v557 = vpop.permute.xlu0 %556
  %560 = vset.pattern.permute.xlu0 0
  %561 = vperm.xlu0 %560, %v467
  %v562 = vpop.permute.xlu0 %561
  %565 = vset.pattern.permute.xlu0 0
  %566 = vperm.xlu0 %565, %v468
  %v567 = vpop.permute.xlu0 %566
  %570 = vset.pattern.permute.xlu0 0
  %571 = vperm.xlu0 %570, %v469
  %v572 = vpop.permute.xlu0 %571
  %575 = vset.pattern.permute.xlu0 0
  %576 = vperm.xlu0 %575, %v470
  %v577 = vpop.permute.xlu0 %576
  %580 = vset.pattern.permute.xlu0 0
  %581 = vperm.xlu0 %580, %v471
  %v582 = vpop.permute.xlu0 %581
  %585 = vset.pattern.permute.xlu0 0
  %586 = vperm.xlu0 %585, %v472
  %v587 = vpop.permute.xlu0 %586
  %590 = vset.pattern.permute.xlu0 0
  %591 = vperm.xlu0 %590, %v473
  %v592 = vpop.permute.xlu0 %591
  %595 = vset.pattern.permute.xlu0 0
  %596 = vperm.xlu0 %595, %v474
  %v597 = vpop.permute.xlu0 %596
  %600 = vset.pattern.permute.xlu0 0
  %601 = vperm.xlu0 %600, %v475
  %v602 = vpop.permute.xlu0 %601
  %605 = vset.pattern.permute.xlu0 0
  %606 = vperm.xlu0 %605, %v476
  %v607 = vpop.permute.xlu0 %606
  %610 = vset.pattern.permute.xlu0 0
  %611 = vperm.xlu0 %610, %v477
  %v612 = vpop.permute.xlu0 %611
  %615 = vset.pattern.permute.xlu0 0
  %616 = vperm.xlu0 %615, %v478
  %v617 = vpop.permute.xlu0 %616
  %620 = vset.pattern.permute.xlu0 0
  %621 = vperm.xlu0 %620, %v479
  %v622 = vpop.permute.xlu0 %621
  %625 = vset.pattern.permute.xlu0 0
  %626 = vperm.xlu0 %625, %v480
  %v627 = vpop.permute.xlu0 %626
  %630 = vset.pattern.permute.xlu0 0
  %631 = vperm.xlu0 %630, %v481
  %v632 = vpop.permute.xlu0 %631
  %635 = vset.pattern.permute.xlu0 0
  %636 = vperm.xlu0 %635, %v482
  %v637 = vpop.permute.xlu0 %636
  %640 = vset.pattern.permute.xlu0 0
  %641 = vperm.xlu0 %640, %v483
  %v642 = vpop.permute.xlu0 %641
  %644 = vmatprep.subr.mxu0 0.0
  %645 = vmatpush1.msra.mxu0 %v404
  %646 = vmatprep.subr.mxu0 0.0
  %647 = vmatpush1.msra.mxu0 %v405
  %648 = vmatprep.subr.mxu0 0.0
  %649 = vmatpush1.msra.mxu0 %v406
  %650 = vmatprep.subr.mxu0 0.0
  %651 = vmatpush1.msra.mxu0 %v407
  %652 = vmatprep.subr.mxu0 0.0
  %653 = vmatpush1.msra.mxu0 %v408
  %654 = vmatprep.subr.mxu0 0.0
  %655 = vmatpush1.msra.mxu0 %v409
  %656 = vmatprep.subr.mxu0 0.0
  %657 = vmatpush1.msra.mxu0 %v410
  %658 = vmatprep.subr.mxu0 0.0
  %659 = vmatpush1.msra.mxu0 %v411
  %660 = vmatprep.subr.mxu0 0.0
  %661 = vmatpush1.msra.mxu0 %v412
  %662 = vmatprep.subr.mxu0 0.0
  %663 = vmatpush1.msra.mxu0 %v413
  %664 = vmatprep.subr.mxu0 0.0
  %665 = vmatpush1.msra.mxu0 %v414
  %666 = vmatprep.subr.mxu0 0.0
  %667 = vmatpush1.msra.mxu0 %v415
  %668 = vmatprep.subr.mxu0 0.0
  %669 = vmatpush1.msra.mxu0 %v416
  %670 = vmatprep.subr.mxu0 0.0
  %671 = vmatpush1.msra.mxu0 %v417
  %672 = vmatprep.subr.mxu0 0.0
  %673 = vmatpush1.msra.mxu0 %v418
  %674 = vmatprep.subr.mxu0 0.0
  %675 = vmatpush1.msra.mxu0 %v419
  %676 = vmatprep.subr.mxu0 0.0
  %677 = vmatpush1.msra.mxu0 0.0
  %678 = vmatprep.subr.mxu0 0.0
  %679 = vmatpush1.msra.mxu0 0.0
  %680 = vmatprep.subr.mxu0 0.0
  %681 = vmatpush1.msra.mxu0 0.0
  %682 = vmatprep.subr.mxu0 0.0
  %683 = vmatpush1.msra.mxu0 0.0
  %684 = vmatprep.subr.mxu0 0.0
  %685 = vmatpush1.msra.mxu0 0.0
  %686 = vmatprep.subr.mxu0 0.0
  %687 = vmatpush1.msra.mxu0 0.0
  %688 = vmatprep.subr.mxu0 0.0
  %689 = vmatpush1.msra.mxu0 0.0
  %690 = vmatprep.subr.mxu0 0.0
  %691 = vmatpush1.msra.mxu0 0.0
  %692 = vmatprep.subr.mxu0 0.0
  %693 = vmatpush1.msra.mxu0 0.0
  %694 = vmatprep.subr.mxu0 0.0
  %695 = vmatpush1.msra.mxu0 0.0
  %696 = vmatprep.subr.mxu0 0.0
  %697 = vmatpush1.msra.mxu0 0.0
  %698 = vmatprep.subr.mxu0 0.0
  %699 = vmatpush1.msra.mxu0 0.0
  %700 = vmatprep.subr.mxu0 0.0
  %701 = vmatpush1.msra.mxu0 0.0
  %702 = vmatprep.subr.mxu0 0.0
  %703 = vmatpush1.msra.mxu0 0.0
  %704 = vmatprep.subr.mxu0 0.0
  %705 = vmatpush1.msra.mxu0 0.0
  %706 = vmatprep.subr.mxu0 0.0
  %707 = vmatpush1.msra.mxu0 0.0
  %708 = vmatprep.mubr.f32.mxu0 0.0
  %709 = vmatmul.mubr.f32.gmra.mrb[0].mxu0 %v420
  %v710 = vpop.f32.mrb[0].mxu0
  %v711 = vadd.f32 %v487, %v710
  %v712 = vpop.f32.mrb[0].mxu0
  %713 = vmatprep.mubr.f32.mxu0 0.0
  %714 = vmatmul.mubr.f32.gmra.mrb[0].mxu0 %v421
  %v715 = vpop.f32.mrb[0].mxu0
  %v716 = vadd.f32 %v492, %v715
  %v717 = vpop.f32.mrb[0].mxu0
  %718 = vmatprep.mubr.f32.mxu0 0.0
  %719 = vmatmul.mubr.f32.gmra.mrb[0].mxu0 %v422
  %v720 = vpop.f32.mrb[0].mxu0
  %v721 = vadd.f32 %v497, %v720
  %v722 = vpop.f32.mrb[0].mxu0
  %723 = vmatprep.mubr.f32.mxu0 0.0
  %724 = vmatmul.mubr.f32.gmra.mrb[0].mxu0 %v423
  %v725 = vpop.f32.mrb[0].mxu0
  %v726 = vadd.f32 %v502, %v725
  %v727 = vpop.f32.mrb[0].mxu0
  %728 = vmatprep.mubr.f32.mxu0 0.0
  %729 = vmatmul.mubr.f32.gmra.mrb[0].mxu0 %v424
  %v730 = vpop.f32.mrb[0].mxu0
  %v731 = vadd.f32 %v507, %v730
  %v732 = vpop.f32.mrb[0].mxu0
  %733 = vmatprep.mubr.f32.mxu0 0.0
  %734 = vmatmul.mubr.f32.gmra.mrb[0].mxu0 %v425
  %v735 = vpop.f32.mrb[0].mxu0
  %v736 = vadd.f32 %v512, %v735
  %v737 = vpop.f32.mrb[0].mxu0
  %738 = vmatprep.mubr.f32.mxu0 0.0
  %739 = vmatmul.mubr.f32.gmra.mrb[0].mxu0 %v426
  %v740 = vpop.f32.mrb[0].mxu0
  %v741 = vadd.f32 %v517, %v740
  %v742 = vpop.f32.mrb[0].mxu0
  %743 = vmatprep.mubr.f32.mxu0 0.0
  %744 = vmatmul.mubr.f32.gmra.mrb[0].mxu0 %v427
  %v745 = vpop.f32.mrb[0].mxu0
  %v746 = vadd.f32 %v522, %v745
  %v747 = vpop.f32.mrb[0].mxu0
  %748 = vmatprep.mubr.f32.mxu0 0.0
  %749 = vmatmul.mubr.f32.gmra.mrb[0].mxu0 %v428
  %v750 = vpop.f32.mrb[0].mxu0
  %v751 = vadd.f32 %v527, %v750
  %v752 = vpop.f32.mrb[0].mxu0
  %753 = vmatprep.mubr.f32.mxu0 0.0
  %754 = vmatmul.mubr.f32.gmra.mrb[0].mxu0 %v429
  %v755 = vpop.f32.mrb[0].mxu0
  %v756 = vadd.f32 %v532, %v755
  %v757 = vpop.f32.mrb[0].mxu0
  %758 = vmatprep.mubr.f32.mxu0 0.0
  %759 = vmatmul.mubr.f32.gmra.mrb[0].mxu0 %v430
  %v760 = vpop.f32.mrb[0].mxu0
  %v761 = vadd.f32 %v537, %v760
  %v762 = vpop.f32.mrb[0].mxu0
  %763 = vmatprep.mubr.f32.mxu0 0.0
  %764 = vmatmul.mubr.f32.gmra.mrb[0].mxu0 %v431
  %v765 = vpop.f32.mrb[0].mxu0
  %v766 = vadd.f32 %v542, %v765
  %v767 = vpop.f32.mrb[0].mxu0
  %768 = vmatprep.mubr.f32.mxu0 0.0
  %769 = vmatmul.mubr.f32.gmra.mrb[0].mxu0 %v432
  %v770 = vpop.f32.mrb[0].mxu0
  %v771 = vadd.f32 %v547, %v770
  %v772 = vpop.f32.mrb[0].mxu0
  %773 = vmatprep.mubr.f32.mxu0 0.0
  %774 = vmatmul.mubr.f32.gmra.mrb[0].mxu0 %v433
  %v775 = vpop.f32.mrb[0].mxu0
  %v776 = vadd.f32 %v552, %v775
  %v777 = vpop.f32.mrb[0].mxu0
  %778 = vmatprep.mubr.f32.mxu0 0.0
  %779 = vmatmul.mubr.f32.gmra.mrb[0].mxu0 %v434
  %v780 = vpop.f32.mrb[0].mxu0
  %v781 = vadd.f32 %v557, %v780
  %v782 = vpop.f32.mrb[0].mxu0
  %783 = vmatprep.mubr.f32.mxu0 0.0
  %784 = vmatmul.mubr.f32.gmra.mrb[0].mxu0 %v435
  %v785 = vpop.f32.mrb[0].mxu0
  %v786 = vadd.f32 %v562, %v785
  %v787 = vpop.f32.mrb[0].mxu0
  %788 = vmatprep.mubr.f32.mxu0 0.0
  %789 = vmatmul.mubr.f32.gmra.mrb[0].mxu0 %v436
  %v790 = vpop.f32.mrb[0].mxu0
  %v791 = vadd.f32 %v567, %v790
  %v792 = vpop.f32.mrb[0].mxu0
  %793 = vmatprep.mubr.f32.mxu0 0.0
  %794 = vmatmul.mubr.f32.gmra.mrb[0].mxu0 %v437
  %v795 = vpop.f32.mrb[0].mxu0
  %v796 = vadd.f32 %v572, %v795
  %v797 = vpop.f32.mrb[0].mxu0
  %798 = vmatprep.mubr.f32.mxu0 0.0
  %799 = vmatmul.mubr.f32.gmra.mrb[0].mxu0 %v438
  %v800 = vpop.f32.mrb[0].mxu0
  %v801 = vadd.f32 %v577, %v800
  %v802 = vpop.f32.mrb[0].mxu0
  %803 = vmatprep.mubr.f32.mxu0 0.0
  %804 = vmatmul.mubr.f32.gmra.mrb[0].mxu0 %v439
  %v805 = vpop.f32.mrb[0].mxu0
  %v806 = vadd.f32 %v582, %v805
  %v807 = vpop.f32.mrb[0].mxu0
  %808 = vmatprep.mubr.f32.mxu0 0.0
  %809 = vmatmul.mubr.f32.gmra.mrb[0].mxu0 %v440
  %v810 = vpop.f32.mrb[0].mxu0
  %v811 = vadd.f32 %v587, %v810
  %v812 = vpop.f32.mrb[0].mxu0
  %813 = vmatprep.mubr.f32.mxu0 0.0
  %814 = vmatmul.mubr.f32.gmra.mrb[0].mxu0 %v441
  %v815 = vpop.f32.mrb[0].mxu0
  %v816 = vadd.f32 %v592, %v815
  %v817 = vpop.f32.mrb[0].mxu0
  %818 = vmatprep.mubr.f32.mxu0 0.0
  %819 = vmatmul.mubr.f32.gmra.mrb[0].mxu0 %v442
  %v820 = vpop.f32.mrb[0].mxu0
  %v821 = vadd.f32 %v597, %v820
  %v822 = vpop.f32.mrb[0].mxu0
  %823 = vmatprep.mubr.f32.mxu0 0.0
  %824 = vmatmul.mubr.f32.gmra.mrb[0].mxu0 %v443
  %v825 = vpop.f32.mrb[0].mxu0
  %v826 = vadd.f32 %v602, %v825
  %v827 = vpop.f32.mrb[0].mxu0
  %828 = vmatprep.mubr.f32.mxu0 0.0
  %829 = vmatmul.mubr.f32.gmra.mrb[0].mxu0 %v444
  %v830 = vpop.f32.mrb[0].mxu0
  %v831 = vadd.f32 %v607, %v830
  %v832 = vpop.f32.mrb[0].mxu0
  %833 = vmatprep.mubr.f32.mxu0 0.0
  %834 = vmatmul.mubr.f32.gmra.mrb[0].mxu0 %v445
  %v835 = vpop.f32.mrb[0].mxu0
  %v836 = vadd.f32 %v612, %v835
  %v837 = vpop.f32.mrb[0].mxu0
  %838 = vmatprep.mubr.f32.mxu0 0.0
  %839 = vmatmul.mubr.f32.gmra.mrb[0].mxu0 %v446
  %v840 = vpop.f32.mrb[0].mxu0
  %v841 = vadd.f32 %v617, %v840
  %v842 = vpop.f32.mrb[0].mxu0
  %843 = vmatprep.mubr.f32.mxu0 0.0
  %844 = vmatmul.mubr.f32.gmra.mrb[0].mxu0 %v447
  %v845 = vpop.f32.mrb[0].mxu0
  %v846 = vadd.f32 %v622, %v845
  %v847 = vpop.f32.mrb[0].mxu0
  %848 = vmatprep.mubr.f32.mxu0 0.0
  %849 = vmatmul.mubr.f32.gmra.mrb[0].mxu0 %v448
  %v850 = vpop.f32.mrb[0].mxu0
  %v851 = vadd.f32 %v627, %v850
  %v852 = vpop.f32.mrb[0].mxu0
  %853 = vmatprep.mubr.f32.mxu0 0.0
  %854 = vmatmul.mubr.f32.gmra.mrb[0].mxu0 %v449
  %v855 = vpop.f32.mrb[0].mxu0
  %v856 = vadd.f32 %v632, %v855
  %v857 = vpop.f32.mrb[0].mxu0
  %858 = vmatprep.mubr.f32.mxu0 0.0
  %859 = vmatmul.mubr.f32.gmra.mrb[0].mxu0 %v450
  %v860 = vpop.f32.mrb[0].mxu0
  %v861 = vadd.f32 %v637, %v860
  %v862 = vpop.f32.mrb[0].mxu0
  %863 = vmatprep.mubr.f32.mxu0 0.0
  %864 = vmatmul.mubr.f32.gmra.mrb[0].mxu0 %v451
  %v865 = vpop.f32.mrb[0].mxu0
  %v866 = vadd.f32 %v642, %v865
  %v867 = vpop.f32.mrb[0].mxu0
  %868 = vdwg.mxu0
  %v869 = vmax.f32 %v711, 0.0
  %v870 = vmax.f32 %v716, 0.0
  %v871 = vmax.f32 %v721, 0.0
  %v872 = vmax.f32 %v726, 0.0
  %v873 = vmax.f32 %v731, 0.0
  %v874 = vmax.f32 %v736, 0.0
  %v875 = vmax.f32 %v741, 0.0
  %v876 = vmax.f32 %v746, 0.0
  %v877 = vmax.f32 %v751, 0.0
  %v878 = vmax.f32 %v756, 0.0
  %v879 = vmax.f32 %v761, 0.0
  %v880 = vmax.f32 %v766, 0.0
  %v881 = vmax.f32 %v771, 0.0
  %v882 = vmax.f32 %v776, 0.0
  %v883 = vmax.f32 %v781, 0.0
  %v884 = vmax.f32 %v786, 0.0
  %v885 = vmax.f32 %v791, 0.0
  %v886 = vmax.f32 %v796, 0.0
  %v887 = vmax.f32 %v801, 0.0
  %v888 = vmax.f32 %v806, 0.0
  %v889 = vmax.f32 %v811, 0.0
  %v890 = vmax.f32 %v816, 0.0
  %v891 = vmax.f32 %v821, 0.0
  %v892 = vmax.f32 %v826, 0.0
  %v893 = vmax.f32 %v831, 0.0
  %v894 = vmax.f32 %v836, 0.0
  %v895 = vmax.f32 %v841, 0.0
  %v896 = vmax.f32 %v846, 0.0
  %v897 = vmax.f32 %v851, 0.0
  %v898 = vmax.f32 %v856, 0.0
  %v899 = vmax.f32 %v861, 0.0
  %v900 = vmax.f32 %v866, 0.0
  %v901 = vld [vmem:[%s5] sm:$0xff]
  %v902 = vld [vmem:[%s5 + $0x8] sm:$0xff]
  %v903 = vld [vmem:[%s5 + $0x10] sm:$0xff]
  %v904 = vld [vmem:[%s5 + $0x18] sm:$0xff]
  %v905 = vld [vmem:[%s5 + $0x20] sm:$0xff]
  %v906 = vld [vmem:[%s5 + $0x28] sm:$0xff]
  %v907 = vld [vmem:[%s5 + $0x30] sm:$0xff]
  %v908 = vld [vmem:[%s5 + $0x38] sm:$0xff]
  %v909 = vld [vmem:[%s5 + $0x40] sm:$0xff]
  %v910 = vld [vmem:[%s5 + $0x48] sm:$0xff]
  %v911 = vld [vmem:[%s5 + $0x50] sm:$0xff]
  %v912 = vld [vmem:[%s5 + $0x58] sm:$0xff]
  %v913 = vld [vmem:[%s5 + $0x60] sm:$0xff]
  %v914 = vld [vmem:[%s5 + $0x68] sm:$0xff]
  %v915 = vld [vmem:[%s5 + $0x70] sm:$0xff]
  %v916 = vld [vmem:[%s5 + $0x78] sm:$0xff]
  %v917 = vld [vmem:[%s5 + $0x80] sm:$0xff]
  %v918 = vld [vmem:[%s5 + $0x88] sm:$0xff]
  %v919 = vld [vmem:[%s5 + $0x90] sm:$0xff]
  %v920 = vld [vmem:[%s5 + $0x98] sm:$0xff]
  %v921 = vld [vmem:[%s5 + $0xa0] sm:$0xff]
  %v922 = vld [vmem:[%s5 + $0xa8] sm:$0xff]
  %v923 = vld [vmem:[%s5 + $0xb0] sm:$0xff]
  %v924 = vld [vmem:[%s5 + $0xb8] sm:$0xff]
  %v925 = vld [vmem:[%s5 + $0xc0] sm:$0xff]
  %v926 = vld [vmem:[%s5 + $0xc8] sm:$0xff]
  %v927 = vld [vmem:[%s5 + $0xd0] sm:$0xff]
  %v928 = vld [vmem:[%s5 + $0xd8] sm:$0xff]
  %v929 = vld [vmem:[%s5 + $0xe0] sm:$0xff]
  %v930 = vld [vmem:[%s5 + $0xe8] sm:$0xff]
  %v931 = vld [vmem:[%s5 + $0xf0] sm:$0xff]
  %v932 = vld [vmem:[%s5 + $0xf8] sm:$0xff]
  %v933 = vld [vmem:[%s6] sm:$0xff]
  %v934 = vld [vmem:[%s6 + $0x8] sm:$0xff]
  %v935 = vld [vmem:[%s6 + $0x10] sm:$0xff]
  %v936 = vld [vmem:[%s6 + $0x18] sm:$0xff]
  %v937 = vld [vmem:[%s6 + $0x20] sm:$0xff]
  %v938 = vld [vmem:[%s6 + $0x28] sm:$0xff]
  %v939 = vld [vmem:[%s6 + $0x30] sm:$0xff]
  %v940 = vld [vmem:[%s6 + $0x38] sm:$0xff]
  %v941 = vld [vmem:[%s6 + $0x40] sm:$0xff]
  %v942 = vld [vmem:[%s6 + $0x48] sm:$0xff]
  %v943 = vld [vmem:[%s6 + $0x50] sm:$0xff]
  %v944 = vld [vmem:[%s6 + $0x58] sm:$0xff]
  %v945 = vld [vmem:[%s6 + $0x60] sm:$0xff]
  %v946 = vld [vmem:[%s6 + $0x68] sm:$0xff]
  %v947 = vld [vmem:[%s6 + $0x70] sm:$0xff]
  %v948 = vld [vmem:[%s6 + $0x78] sm:$0xff]
  %950 = vset.pattern.permute.xlu0 0
  %951 = vperm.xlu0 %950, %v933
  %v952 = vpop.permute.xlu0 %951
  %955 = vset.pattern.permute.xlu0 0
  %956 = vperm.xlu0 %955, %v934
  %v957 = vpop.permute.xlu0 %956
  %960 = vset.pattern.permute.xlu0 0
  %961 = vperm.xlu0 %960, %v935
  %v962 = vpop.permute.xlu0 %961
  %965 = vset.pattern.permute.xlu0 0
  %966 = vperm.xlu0 %965, %v936
  %v967 = vpop.permute.xlu0 %966
  %970 = vset.pattern.permute.xlu0 0
  %971 = vperm.xlu0 %970, %v937
  %v972 = vpop.permute.xlu0 %971
  %975 = vset.pattern.permute.xlu0 0
  %976 = vperm.xlu0 %975, %v938
  %v977 = vpop.permute.xlu0 %976
  %980 = vset.pattern.permute.xlu0 0
  %981 = vperm.xlu0 %980, %v939
  %v982 = vpop.permute.xlu0 %981
  %985 = vset.pattern.permute.xlu0 0
  %986 = vperm.xlu0 %985, %v940
  %v987 = vpop.permute.xlu0 %986
  %990 = vset.pattern.permute.xlu0 0
  %991 = vperm.xlu0 %990, %v941
  %v992 = vpop.permute.xlu0 %991
  %995 = vset.pattern.permute.xlu0 0
  %996 = vperm.xlu0 %995, %v942
  %v997 = vpop.permute.xlu0 %996
  %1000 = vset.pattern.permute.xlu0 0
  %1001 = vperm.xlu0 %1000, %v943
  %v1002 = vpop.permute.xlu0 %1001
  %1005 = vset.pattern.permute.xlu0 0
  %1006 = vperm.xlu0 %1005, %v944
  %v1007 = vpop.permute.xlu0 %1006
  %1010 = vset.pattern.permute.xlu0 0
  %1011 = vperm.xlu0 %1010, %v945
  %v1012 = vpop.permute.xlu0 %1011
  %1015 = vset.pattern.permute.xlu0 0
  %1016 = vperm.xlu0 %1015, %v946
  %v1017 = vpop.permute.xlu0 %1016
  %1020 = vset.pattern.permute.xlu0 0
  %1021 = vperm.xlu0 %1020, %v947
  %v1022 = vpop.permute.xlu0 %1021
  %1025 = vset.pattern.permute.xlu0 0
  %1026 = vperm.xlu0 %1025, %v948
  %v1027 = vpop.permute.xlu0 %1026
  %1029 = vmatprep.subr.mxu0 0.0
  %1030 = vmatpush1.msra.mxu0 %v869
  %1031 = vmatprep.subr.mxu0 0.0
  %1032 = vmatpush1.msra.mxu0 %v870
  %1033 = vmatprep.subr.mxu0 0.0
  %1034 = vmatpush1.msra.mxu0 %v871
  %1035 = vmatprep.subr.mxu0 0.0
  %1036 = vmatpush1.msra.mxu0 %v872
  %1037 = vmatprep.subr.mxu0 0.0
  %1038 = vmatpush1.msra.mxu0 %v873
  %1039 = vmatprep.subr.mxu0 0.0
  %1040 = vmatpush1.msra.mxu0 %v874
  %1041 = vmatprep.subr.mxu0 0.0
  %1042 = vmatpush1.msra.mxu0 %v875
  %1043 = vmatprep.subr.mxu0 0.0
  %1044 = vmatpush1.msra.mxu0 %v876
  %1045 = vmatprep.subr.mxu0 0.0
  %1046 = vmatpush1.msra.mxu0 %v877
  %1047 = vmatprep.subr.mxu0 0.0
  %1048 = vmatpush1.msra.mxu0 %v878
  %1049 = vmatprep.subr.mxu0 0.0
  %1050 = vmatpush1.msra.mxu0 %v879
  %1051 = vmatprep.subr.mxu0 0.0
  %1052 = vmatpush1.msra.mxu0 %v880
  %1053 = vmatprep.subr.mxu0 0.0
  %1054 = vmatpush1.msra.mxu0 %v881
  %1055 = vmatprep.subr.mxu0 0.0
  %1056 = vmatpush1.msra.mxu0 %v882
  %1057 = vmatprep.subr.mxu0 0.0
  %1058 = vmatpush1.msra.mxu0 %v883
  %1059 = vmatprep.subr.mxu0 0.0
  %1060 = vmatpush1.msra.mxu0 %v884
  %1061 = vmatprep.subr.mxu0 0.0
  %1062 = vmatpush1.msra.mxu0 %v885
  %1063 = vmatprep.subr.mxu0 0.0
  %1064 = vmatpush1.msra.mxu0 %v886
  %1065 = vmatprep.subr.mxu0 0.0
  %1066 = vmatpush1.msra.mxu0 %v887
  %1067 = vmatprep.subr.mxu0 0.0
  %1068 = vmatpush1.msra.mxu0 %v888
  %1069 = vmatprep.subr.mxu0 0.0
  %1070 = vmatpush1.msra.mxu0 %v889
  %1071 = vmatprep.subr.mxu0 0.0
  %1072 = vmatpush1.msra.mxu0 %v890
  %1073 = vmatprep.subr.mxu0 0.0
  %1074 = vmatpush1.msra.mxu0 %v891
  %1075 = vmatprep.subr.mxu0 0.0
  %1076 = vmatpush1.msra.mxu0 %v892
  %1077 = vmatprep.subr.mxu0 0.0
  %1078 = vmatpush1.msra.mxu0 %v893
  %1079 = vmatprep.subr.mxu0 0.0
  %1080 = vmatpush1.msra.mxu0 %v894
  %1081 = vmatprep.subr.mxu0 0.0
  %1082 = vmatpush1.msra.mxu0 %v895
  %1083 = vmatprep.subr.mxu0 0.0
  %1084 = vmatpush1.msra.mxu0 %v896
  %1085 = vmatprep.subr.mxu0 0.0
  %1086 = vmatpush1.msra.mxu0 %v897
  %1087 = vmatprep.subr.mxu0 0.0
  %1088 = vmatpush1.msra.mxu0 %v898
  %1089 = vmatprep.subr.mxu0 0.0
  %1090 = vmatpush1.msra.mxu0 %v899
  %1091 = vmatprep.subr.mxu0 0.0
  %1092 = vmatpush1.msra.mxu0 %v900
  %1093 = vmatprep.mubr.f32.mxu0 %v902
  %1094 = vmatmul.mubr.f32.gmra.mrb[0].mxu0 %v901
  %v1095 = vpop.f32.mrb[0].mxu0
  %v1096 = vadd.f32 %v952, %v1095
  %v1097 = vpop.f32.mrb[0].mxu0
  %1098 = vmatprep.mubr.f32.mxu0 %v904
  %1099 = vmatmul.mubr.f32.gmra.mrb[0].mxu0 %v903
  %v1100 = vpop.f32.mrb[0].mxu0
  %v1101 = vadd.f32 %v957, %v1100
  %v1102 = vpop.f32.mrb[0].mxu0
  %1103 = vmatprep.mubr.f32.mxu0 %v906
  %1104 = vmatmul.mubr.f32.gmra.mrb[0].mxu0 %v905
  %v1105 = vpop.f32.mrb[0].mxu0
  %v1106 = vadd.f32 %v962, %v1105
  %v1107 = vpop.f32.mrb[0].mxu0
  %1108 = vmatprep.mubr.f32.mxu0 %v908
  %1109 = vmatmul.mubr.f32.gmra.mrb[0].mxu0 %v907
  %v1110 = vpop.f32.mrb[0].mxu0
  %v1111 = vadd.f32 %v967, %v1110
  %v1112 = vpop.f32.mrb[0].mxu0
  %1113 = vmatprep.mubr.f32.mxu0 %v910
  %1114 = vmatmul.mubr.f32.gmra.mrb[0].mxu0 %v909
  %v1115 = vpop.f32.mrb[0].mxu0
  %v1116 = vadd.f32 %v972, %v1115
  %v1117 = vpop.f32.mrb[0].mxu0
  %1118 = vmatprep.mubr.f32.mxu0 %v912
  %1119 = vmatmul.mubr.f32.gmra.mrb[0].mxu0 %v911
  %v1120 = vpop.f32.mrb[0].mxu0
  %v1121 = vadd.f32 %v977, %v1120
  %v1122 = vpop.f32.mrb[0].mxu0
  %1123 = vmatprep.mubr.f32.mxu0 %v914
  %1124 = vmatmul.mubr.f32.gmra.mrb[0].mxu0 %v913
  %v1125 = vpop.f32.mrb[0].mxu0
  %v1126 = vadd.f32 %v982, %v1125
  %v1127 = vpop.f32.mrb[0].mxu0
  %1128 = vmatprep.mubr.f32.mxu0 %v916
  %1129 = vmatmul.mubr.f32.gmra.mrb[0].mxu0 %v915
  %v1130 = vpop.f32.mrb[0].mxu0
  %v1131 = vadd.f32 %v987, %v1130
  %v1132 = vpop.f32.mrb[0].mxu0
  %1133 = vmatprep.mubr.f32.mxu0 %v918
  %1134 = vmatmul.mubr.f32.gmra.mrb[0].mxu0 %v917
  %v1135 = vpop.f32.mrb[0].mxu0
  %v1136 = vadd.f32 %v992, %v1135
  %v1137 = vpop.f32.mrb[0].mxu0
  %1138 = vmatprep.mubr.f32.mxu0 %v920
  %1139 = vmatmul.mubr.f32.gmra.mrb[0].mxu0 %v919
  %v1140 = vpop.f32.mrb[0].mxu0
  %v1141 = vadd.f32 %v997, %v1140
  %v1142 = vpop.f32.mrb[0].mxu0
  %1143 = vmatprep.mubr.f32.mxu0 %v922
  %1144 = vmatmul.mubr.f32.gmra.mrb[0].mxu0 %v921
  %v1145 = vpop.f32.mrb[0].mxu0
  %v1146 = vadd.f32 %v1002, %v1145
  %v1147 = vpop.f32.mrb[0].mxu0
  %1148 = vmatprep.mubr.f32.mxu0 %v924
  %1149 = vmatmul.mubr.f32.gmra.mrb[0].mxu0 %v923
  %v1150 = vpop.f32.mrb[0].mxu0
  %v1151 = vadd.f32 %v1007, %v1150
  %v1152 = vpop.f32.mrb[0].mxu0
  %1153 = vmatprep.mubr.f32.mxu0 %v926
  %1154 = vmatmul.mubr.f32.gmra.mrb[0].mxu0 %v925
  %v1155 = vpop.f32.mrb[0].mxu0
  %v1156 = vadd.f32 %v1012, %v1155
  %v1157 = vpop.f32.mrb[0].mxu0
  %1158 = vmatprep.mubr.f32.mxu0 %v928
  %1159 = vmatmul.mubr.f32.gmra.mrb[0].mxu0 %v927
  %v1160 = vpop.f32.mrb[0].mxu0
  %v1161 = vadd.f32 %v1017, %v1160
  %v1162 = vpop.f32.mrb[0].mxu0
  %1163 = vmatprep.mubr.f32.mxu0 %v930
  %1164 = vmatmul.mubr.f32.gmra.mrb[0].mxu0 %v929
  %v1165 = vpop.f32.mrb[0].mxu0
  %v1166 = vadd.f32 %v1022, %v1165
  %v1167 = vpop.f32.mrb[0].mxu0
  %1168 = vmatprep.mubr.f32.mxu0 %v932
  %1169 = vmatmul.mubr.f32.gmra.mrb[0].mxu0 %v931
  %v1170 = vpop.f32.mrb[0].mxu0
  %v1171 = vadd.f32 %v1027, %v1170
  %v1172 = vpop.f32.mrb[0].mxu0
  %1173 = vdwg.mxu0
  %v1174 = vmax.f32 %v1096, 0.0
  %v1175 = vmax.f32 %v1101, 0.0
  %v1176 = vmax.f32 %v1106, 0.0
  %v1177 = vmax.f32 %v1111, 0.0
  %v1178 = vmax.f32 %v1116, 0.0
  %v1179 = vmax.f32 %v1121, 0.0
  %v1180 = vmax.f32 %v1126, 0.0
  %v1181 = vmax.f32 %v1131, 0.0
  %v1182 = vmax.f32 %v1136, 0.0
  %v1183 = vmax.f32 %v1141, 0.0
  %v1184 = vmax.f32 %v1146, 0.0
  %v1185 = vmax.f32 %v1151, 0.0
  %v1186 = vmax.f32 %v1156, 0.0
  %v1187 = vmax.f32 %v1161, 0.0
  %v1188 = vmax.f32 %v1166, 0.0
  %v1189 = vmax.f32 %v1171, 0.0
  %v1190 = vld [vmem:[%s7] sm:$0xff]
  %v1191 = vld [vmem:[%s7 + $0x8] sm:$0xff]
  %v1192 = vld [vmem:[%s7 + $0x10] sm:$0xff]
  %v1193 = vld [vmem:[%s7 + $0x18] sm:$0xff]
  %v1194 = vld [vmem:[%s7 + $0x20] sm:$0xff]
  %v1195 = vld [vmem:[%s7 + $0x28] sm:$0xff]
  %v1196 = vld [vmem:[%s7 + $0x30] sm:$0xff]
  %v1197 = vld [vmem:[%s7 + $0x38] sm:$0xff]
  %v1198 = vld [vmem:[%s7 + $0x40] sm:$0xff]
  %v1199 = vld [vmem:[%s7 + $0x48] sm:$0xff]
  %v1200 = vld [vmem:[%s7 + $0x50] sm:$0xff]
  %v1201 = vld [vmem:[%s7 + $0x58] sm:$0xff]
  %v1202 = vld [vmem:[%s7 + $0x60] sm:$0xff]
  %v1203 = vld [vmem:[%s7 + $0x68] sm:$0xff]
  %v1204 = vld [vmem:[%s7 + $0x70] sm:$0xff]
  %v1205 = vld [vmem:[%s7 + $0x78] sm:$0xff]
  %1207 = vset.pattern.permute.xlu0 0
  %1208 = vperm.xlu0 %1207, %v1190
  %v1209 = vpop.permute.xlu0 %1208
  %1212 = vset.pattern.permute.xlu0 0
  %1213 = vperm.xlu0 %1212, %v1191
  %v1214 = vpop.permute.xlu0 %1213
  %1217 = vset.pattern.permute.xlu0 0
  %1218 = vperm.xlu0 %1217, %v1192
  %v1219 = vpop.permute.xlu0 %1218
  %1222 = vset.pattern.permute.xlu0 0
  %1223 = vperm.xlu0 %1222, %v1193
  %v1224 = vpop.permute.xlu0 %1223
  %1227 = vset.pattern.permute.xlu0 0
  %1228 = vperm.xlu0 %1227, %v1194
  %v1229 = vpop.permute.xlu0 %1228
  %1232 = vset.pattern.permute.xlu0 0
  %1233 = vperm.xlu0 %1232, %v1195
  %v1234 = vpop.permute.xlu0 %1233
  %1237 = vset.pattern.permute.xlu0 0
  %1238 = vperm.xlu0 %1237, %v1196
  %v1239 = vpop.permute.xlu0 %1238
  %1242 = vset.pattern.permute.xlu0 0
  %1243 = vperm.xlu0 %1242, %v1197
  %v1244 = vpop.permute.xlu0 %1243
  %1247 = vset.pattern.permute.xlu0 0
  %1248 = vperm.xlu0 %1247, %v1198
  %v1249 = vpop.permute.xlu0 %1248
  %1252 = vset.pattern.permute.xlu0 0
  %1253 = vperm.xlu0 %1252, %v1199
  %v1254 = vpop.permute.xlu0 %1253
  %1257 = vset.pattern.permute.xlu0 0
  %1258 = vperm.xlu0 %1257, %v1200
  %v1259 = vpop.permute.xlu0 %1258
  %1262 = vset.pattern.permute.xlu0 0
  %1263 = vperm.xlu0 %1262, %v1201
  %v1264 = vpop.permute.xlu0 %1263
  %1267 = vset.pattern.permute.xlu0 0
  %1268 = vperm.xlu0 %1267, %v1202
  %v1269 = vpop.permute.xlu0 %1268
  %1272 = vset.pattern.permute.xlu0 0
  %1273 = vperm.xlu0 %1272, %v1203
  %v1274 = vpop.permute.xlu0 %1273
  %1277 = vset.pattern.permute.xlu0 0
  %1278 = vperm.xlu0 %1277, %v1204
  %v1279 = vpop.permute.xlu0 %1278
  %1282 = vset.pattern.permute.xlu0 0
  %1283 = vperm.xlu0 %1282, %v1205
  %v1284 = vpop.permute.xlu0 %1283
  %v1286 = vmul.f32 %v1174, %v1209
  %v1287 = vmul.f32 %v1175, %v1214
  %v1288 = vmul.f32 %v1176, %v1219
  %v1289 = vmul.f32 %v1177, %v1224
  %v1290 = vmul.f32 %v1178, %v1229
  %v1291 = vmul.f32 %v1179, %v1234
  %v1292 = vmul.f32 %v1180, %v1239
  %v1293 = vmul.f32 %v1181, %v1244
  %v1294 = vmul.f32 %v1182, %v1249
  %v1295 = vmul.f32 %v1183, %v1254
  %v1296 = vmul.f32 %v1184, %v1259
  %v1297 = vmul.f32 %v1185, %v1264
  %v1298 = vmul.f32 %v1186, %v1269
  %v1299 = vmul.f32 %v1187, %v1274
  %v1300 = vmul.f32 %v1188, %v1279
  %v1301 = vmul.f32 %v1189, %v1284
  %v1302 = vadd.f32 %v1286, %v1287
  %v1303 = vadd.f32 %v1302, %v1288
  %v1304 = vadd.f32 %v1303, %v1289
  %v1305 = vadd.f32 %v1304, %v1290
  %v1306 = vadd.f32 %v1305, %v1291
  %v1307 = vadd.f32 %v1306, %v1292
  %v1308 = vadd.f32 %v1307, %v1293
  %v1309 = vadd.f32 %v1308, %v1294
  %v1310 = vadd.f32 %v1309, %v1295
  %v1311 = vadd.f32 %v1310, %v1296
  %v1312 = vadd.f32 %v1311, %v1297
  %v1313 = vadd.f32 %v1312, %v1298
  %v1314 = vadd.f32 %v1313, %v1299
  %v1315 = vadd.f32 %v1314, %v1300
  %v1316 = vadd.f32 %v1315, %v1301
  %v1317 = vrot.slane %v1316, 4
  %v1318 = vadd.f32 %v1316, %v1317
  %v1319 = vrot.slane %v1318, 2
  %v1320 = vadd.f32 %v1318, %v1319
  %v1321 = vrot.slane %v1320, 1
  %v1322 = vadd.f32 %v1320, %v1321
  %v1323 = vld [vmem:[#allocation2] sm:$0x1]
  %1325 = vset.pattern.permute.xlu0 0
  %1326 = vperm.xlu0 %1325, %v1323
  %v1327 = vpop.permute.xlu0 %1326
  %v1329 = vlaneseq
  %v1330 = vshrl.u32 %v1329, 7
  %v1331 = vsub.s32 0, %v1330
  %v1332 = vrot.slane %v1327, %v1331
  %v1333 = vadd.f32 %v1322, %v1332
  %1334 = vst [vmem:[%s9] sm:$0x1] %v1333
  // Predicated region
  $region38: #{_anc_forward.1} parent=0 // pred_check
    _
  $region39: #{_anc_forward.1} parent=0 // pred_check_branch
    %1336 = sbr.rel (0) target = $region41
  $region40: #{_anc_forward.1} parent=0 // pred_region
    _
  $region41: #{_anc_forward.1} parent=0 // pred_fallthru
    _
  // Predicated region
  $region42: #{_anc_forward.1} parent=0 // pred_check
    _
  $region43: #{_anc_forward.1} parent=0 // pred_check_branch
    %1338 = sbr.rel (0) target = $region45
  $region44: #{_anc_forward.1} parent=0 // pred_region
    _
  $region45: #{_anc_forward.1} parent=0 // pred_fallthru
    _

</llo_original>
